<compile_context>
chip_gen: v7x
topology: tpu7x:2x2x1
jax: 0.10.0
libtpu: 0.0.40
codegen_flags: <defaults>
</compile_context>

<pallas_src>
import functools
from dataclasses import dataclass

import jax
import jax.numpy as jnp
from jax import lax
from jax.experimental import pallas as pl
from jax.experimental.pallas import tpu as pltpu


@dataclass
class Config:
    masking_percentage: float = 0.75
    masking_strategy: str = "random"


# ----------------------------------------------------------------------------
# Pallas kernel: gather unmasked patch rows via one-hot MXU matmul.
#   idx_ref : (bb, n, 1) int32  -- unmasked row indices for this block
#   x_ref   : (bb, P, E)        -- full per-batch patch slabs (streamed)
#   o_ref   : (bb, n, E)        -- gathered rows
# ----------------------------------------------------------------------------
def _gather_kernel(idx_ref, x_ref, o_ref):
    bb, n, _ = o_ref.shape
    P = x_ref.shape[1]
    # onehot[b, j, p] = (p == idx[b, j]); exact row selection when matmul'd.
    patch_ids = lax.broadcasted_iota(jnp.int32, (bb, n, P), 2)
    onehot = (patch_ids == idx_ref[...]).astype(x_ref.dtype)
    o_ref[...] = jnp.einsum(
        "bnp,bpe->bne", onehot, x_ref[...],
        preferred_element_type=jnp.float32,
    ).astype(o_ref.dtype)


def gather_unmasked(patch_embeddings: jax.Array, unmasked_indices: jax.Array,
                    *, vmem_budget_bytes: int = 12 * 1024 * 1024):
    """out[b, j] = patch_embeddings[b, unmasked_indices[b, j]] (Pallas)."""
    B, P, E = patch_embeddings.shape
    n = unmasked_indices.shape[1]
    if n == 0:  # masking_percentage == 1.0 -> nothing to gather
        return jnp.zeros((B, 0, E), patch_embeddings.dtype)

    itemsize = jnp.dtype(patch_embeddings.dtype).itemsize
    # Double-buffered VMEM per batch item: source slab + output block + idx.
    per_b = 2 * ((P + n) * E * itemsize + n * 4)
    bb = max(1, min(B, vmem_budget_bytes // max(per_b, 1)))
    while B % bb:  # keep the grid exact (largest divisor of B within budget)
        bb -= 1

    idx3 = unmasked_indices.astype(jnp.int32)[:, :, None]  # (B, n, 1), reshape only

    return pl.pallas_call(
        _gather_kernel,
        out_shape=jax.ShapeDtypeStruct((B, n, E), patch_embeddings.dtype),
        grid=(B // bb,),
        in_specs=[
            pl.BlockSpec((bb, n, 1), lambda g: (g, 0, 0)),   # indices (VMEM)
            pl.BlockSpec((bb, P, E), lambda g: (g, 0, 0)),   # source slabs
        ],
        out_specs=pl.BlockSpec((bb, n, E), lambda g: (g, 0, 0)),
        compiler_params=pltpu.CompilerParams(
            dimension_semantics=("parallel",),        # shards B across TCs on v7x
            vmem_limit_bytes=32 * 1024 * 1024,        # explicit; safe on v5e..v7x
        ),
    )(idx3, patch_embeddings)


# ----------------------------------------------------------------------------
# Jitted forward core: rand + argsort + scatter-mask + Pallas gather.
# ----------------------------------------------------------------------------
@functools.partial(jax.jit, static_argnums=(2,))
def _mask_forward_core(patch_embeddings, key, num_masked):
    B, P, E = patch_embeddings.shape

    # torch.rand(B, P).argsort(dim=1) -> uniform random permutation.
    rand = jax.random.uniform(key, (B, P))
    perm = jnp.argsort(rand, axis=1).astype(jnp.int32)

    masked_indices = perm[:, :num_masked]
    unmasked_indices = perm[:, num_masked:]

    # bool_mask: scatter True at masked positions (matches torch scatter_).
    bool_mask = jnp.zeros((B, P), jnp.bool_)
    if num_masked > 0:
        bool_mask = jax.vmap(lambda m, i: m.at[i].set(True))(bool_mask,
                                                             masked_indices)

    unmasked_patches_only = gather_unmasked(patch_embeddings, unmasked_indices)
    return unmasked_patches_only, bool_mask, masked_indices, unmasked_indices


# ----------------------------------------------------------------------------
# Module-level forward (mirrors Mask.forward)
# ----------------------------------------------------------------------------
class Mask:
    def __init__(self, config: Config):
        self.config = config
        self.masking_percentage = config.masking_percentage
        self.masking_strategy = config.masking_strategy

    def forward(self, patch_embeddings: jax.Array, key: jax.Array):
        B, num_patches, embed_dim = patch_embeddings.shape
        num_masked = int(self.masking_percentage * num_patches)

        # ('random' and the fallback branch are identical, as in the reference)
        (unmasked_patches_only, bool_mask,
         masked_indices, unmasked_indices) = _mask_forward_core(
             patch_embeddings, key, num_masked)

        # Per-batch lists kept only to match the torch API (cheap slices).
        masked_indices_list = [masked_indices[b] for b in range(B)]
        unmasked_indices_list = [unmasked_indices[b] for b in range(B)]
        return (unmasked_patches_only, bool_mask,
                masked_indices_list, unmasked_indices_list)

    def get_mask_ratio(self) -> float:
        return self.masking_percentage

    def set_mask_ratio(self, ratio: float):
        assert 0.0 <= ratio <= 1.0, "Masking ratio must be between 0 and 1"
        self.masking_percentage = ratio


if __name__ == "__main__":
    # Small deterministic example: B=2, num_patches=16, embed_dim=32.
    B, P, E = 2, 16, 32
    cfg = Config(masking_percentage=0.75, masking_strategy="random")
    mask_mod = Mask(cfg)

    root = jax.random.PRNGKey(0)
    k_x, k_perm = jax.random.split(root)
    patch_embeddings = jax.random.normal(k_x, (B, P, E), dtype=jnp.float32)

    (unmasked_patches, bool_mask,
     masked_idx_list, unmasked_idx_list) = mask_mod.forward(patch_embeddings,
                                                            k_perm)
    unmasked_patches = jax.block_until_ready(unmasked_patches)
    bool_mask = jax.block_until_ready(bool_mask)

    # Reference check in plain JAX.
    num_masked = int(cfg.masking_percentage * P)
    rand = jax.random.uniform(k_perm, (B, P))
    perm = jnp.argsort(rand, axis=1).astype(jnp.int32)
    uidx = perm[:, num_masked:]
    midx = perm[:, :num_masked]
    ref_gather = jnp.take_along_axis(patch_embeddings, uidx[:, :, None], axis=1)
    ref_mask = jnp.zeros((B, P), jnp.bool_)
    ref_mask = jax.vmap(lambda m, i: m.at[i].set(True))(ref_mask, midx)

    assert unmasked_patches.shape == (B, P - num_masked, E)
    assert bool_mask.shape == (B, P) and bool_mask.dtype == jnp.bool_
    assert jnp.allclose(unmasked_patches, ref_gather)
    assert jnp.array_equal(bool_mask, ref_mask)
    assert int(bool_mask.sum()) == B * num_masked
    assert all(jnp.array_equal(a, b) for a, b in zip(masked_idx_list, list(midx)))
    assert all(jnp.array_equal(a, b) for a, b in zip(unmasked_idx_list, list(uidx)))

    print("KERNEL_OK")
</pallas_src>

<mosaic_0001>
module attributes {stable_mosaic.version = 11 : i64} {
  func.func @_gather_kernel(%arg0: i32, %arg1: memref<2x4x1xi32, #tpu.memory_space<vmem>>, %arg2: memref<2x16x32xf32, #tpu.memory_space<vmem>>, %arg3: memref<2x4x32xf32, #tpu.memory_space<vmem>>) attributes {dimension_semantics = [#tpu.dimension_semantics<parallel>], iteration_bounds = array<i64: 1>, scalar_prefetch = 0 : i64, scratch_operands = 0 : i64, tpu.core_type = #tpu.core_type<tc>, window_params = [{transform_indices = @transform_0, window_bounds = array<i64: 2, 4, 1>}, {transform_indices = @transform_1, window_bounds = array<i64: 2, 16, 32>}, {transform_indices = @transform_2, window_bounds = array<i64: 2, 4, 32>}]} {
    %0 = tpu.iota {dimensions = array<i32: 2>} : vector<2x4x16xi32>
    %c0 = arith.constant 0 : index
    %c0_0 = arith.constant 0 : index
    %c0_1 = arith.constant 0 : index
    %1 = vector.load %arg1[%c0, %c0_0, %c0_1] : memref<2x4x1xi32, #tpu.memory_space<vmem>>, vector<2x4x1xi32>
    %2 = vector.broadcast %1 : vector<2x4x1xi32> to vector<2x4x16xi32>
    %3 = arith.cmpi eq, %0, %2 : vector<2x4x16xi32>
    %4 = arith.extui %3 : vector<2x4x16xi1> to vector<2x4x16xi32>
    %5 = arith.sitofp %4 : vector<2x4x16xi32> to vector<2x4x16xf32>
    %c0_2 = arith.constant 0 : index
    %c0_3 = arith.constant 0 : index
    %c0_4 = arith.constant 0 : index
    %6 = vector.load %arg2[%c0_2, %c0_3, %c0_4] : memref<2x16x32xf32, #tpu.memory_space<vmem>>, vector<2x16x32xf32>
    "tpu.trace_start"() <{level = 10 : i32, message = "bnp,bpe->bne"}> : () -> ()
    %cst = arith.constant dense<0.000000e+00> : vector<2x4x32xf32>
    %7 = tpu.matmul %5, %6, %cst {dimension_numbers = #tpu.dot_dimension_numbers<[2], [1], [1], [2], [0, 0, 0, 1, 1, 2], [0], [0]>} : vector<2x4x16xf32>, vector<2x16x32xf32>, vector<2x4x32xf32> -> vector<2x4x32xf32>
    "tpu.trace_stop"() : () -> ()
    %c0_5 = arith.constant 0 : index
    %c0_6 = arith.constant 0 : index
    %c0_7 = arith.constant 0 : index
    %8 = vector.load %arg3[%c0_5, %c0_6, %c0_7] : memref<2x4x32xf32, #tpu.memory_space<vmem>>, vector<2x4x32xf32>
    tpu.vector_store %arg3[%c0_5, %c0_6, %c0_7], %7 {strides = array<i32>} : memref<2x4x32xf32, #tpu.memory_space<vmem>>, vector<2x4x32xf32>,
    return
  }
  func.func @transform_0(%arg0: i32) -> (i32, i32, i32) {
    %c0_i32 = arith.constant 0 : i32
    %c0_i32_0 = arith.constant 0 : i32
    %c0_i32_1 = arith.constant 0 : i32
    return %arg0, %c0_i32, %c0_i32_0 : i32, i32, i32
  }
  func.func @transform_1(%arg0: i32) -> (i32, i32, i32) {
    %c0_i32 = arith.constant 0 : i32
    %c0_i32_0 = arith.constant 0 : i32
    %c0_i32_1 = arith.constant 0 : i32
    return %arg0, %c0_i32, %c0_i32_0 : i32, i32, i32
  }
  func.func @transform_2(%arg0: i32) -> (i32, i32, i32) {
    %c0_i32 = arith.constant 0 : i32
    %c0_i32_0 = arith.constant 0 : i32
    %c0_i32_1 = arith.constant 0 : i32
    return %arg0, %c0_i32, %c0_i32_0 : i32, i32, i32
  }
}

</mosaic_0001>

<llo_original>
// kernel: _mask_forward_core.1
$region0: #{_mask_forward_core.1}
  #allocation0 [shape = 'u32[]', space=smem, size = 0x4, offset = 0x4, fixed_abs, tag = 'smem constant byte address 0x4 - core index']
  #allocation1 [shape = 'u32[144,128]{1,0:T(1,128)}', space=vmem, size = 0x12000, scoped, tag = 'internal scratch']
  %s0 = inlined_call_operand.vmem [shape: s32[2,4,1], index: 0, kind: input, shape index: {}]
  %s1 = inlined_call_operand.vmem [shape: f32[2,16,32], index: 1, kind: input, shape index: {}]
  %s2 = inlined_call_operand.hbm [shape: f32[2,4,32], index: 2, kind: output, shape index: {}]
  %s3 = sld [smem:[#allocation0]]
  $region18: #{_mask_forward_core.1} parent=0
    _
  %s5 = ssub.s32 1, %s3
  %s6 = scalar_select 0, %s5, %s3
  $region1: #{_mask_forward_core.1} parent=0
    #allocation2 [shape = 'u8[4096]{0}', space=vmem, size = 0x1000, scoped, tag = 'output window, operand 0, single buffered']
    #allocation3 [shape = 's32[1]{0}', space=sflag, size = 0x4, scoped, tag = 'scoped memory for _mask_forward_core.1']
    %7 = vsyncpa [#allocation3], 0
    // Predicated region
    $region2: #{_mask_forward_core.1} parent=1 // pred_check
      _
    $region3: #{_mask_forward_core.1} parent=1 // pred_check_branch
      %9 = sbr.rel (0) target = $region5
    $region4: #{_mask_forward_core.1} parent=1 // pred_region
      _
    $region5: #{_mask_forward_core.1} parent=1 // pred_fallthru
      _
    // Predicated region
    $region6: #{_mask_forward_core.1} parent=1 // pred_check
      _
    $region7: #{_mask_forward_core.1} parent=1 // pred_check_branch
      %11 = sbr.rel (0) target = $region9
    $region8: #{_mask_forward_core.1} parent=1 // pred_region
      _
    $region9: #{_mask_forward_core.1} parent=1 // pred_fallthru
      _
    %v12 = vlaneseq
    %v13 = vand.u32 %v12, 127
    %v14 = vld [vmem:[%s0] sm:$0xf]
    %v15 = vld [vmem:[%s0 + $0x4] sm:$0xf]
    %16 = vset.pattern.permute.xlu0 0
    %17 = vperm.xlu0 %16, %v14
    %v18 = vpop.permute.xlu0 %17
    %19 = vset.pattern.permute.xlu0 0
    %20 = vperm.xlu0 %19, %v15
    %v21 = vpop.permute.xlu0 %20
    %vm22 = vcmp.eq.s32.totalorder %v13, %v18
    %vm23 = vcmp.eq.s32.totalorder %v13, %v21
    %v24 = vsel %vm22, 1, 0
    %v25 = vsel %vm23, 1, 0
    %v26 = vcvt.s32.f32 %v24
    %v27 = vcvt.s32.f32 %v25
    %v28 = vld [vmem:[%s1] sm:$0xff]
    %v29 = vld [vmem:[%s1 + $0x8] sm:$0xff]
    %v30 = vld [vmem:[%s1 + $0x10] sm:$0xff]
    %v31 = vld [vmem:[%s1 + $0x18] sm:$0xff]
    %vm32 = vcmask 130048
    %v34 = vsel %vm32, %v26, 0
    %36 = vmatprep.subr.mxu0 0.0
    %37 = vmatpush1.msra.mxu0 %v28
    %38 = vmatprep.subr.mxu0 0.0
    %39 = vmatpush1.msra.mxu0 %v29
    %40 = vmatprep.subr.mxu0 0.0
    %41 = vmatpush1.msra.mxu0 0.0
    %42 = vmatprep.subr.mxu0 0.0
    %43 = vmatpush1.msra.mxu0 0.0
    %44 = vmatprep.subr.mxu0 0.0
    %45 = vmatpush1.msra.mxu0 0.0
    %46 = vmatprep.subr.mxu0 0.0
    %47 = vmatpush1.msra.mxu0 0.0
    %48 = vmatprep.subr.mxu0 0.0
    %49 = vmatpush1.msra.mxu0 0.0
    %50 = vmatprep.subr.mxu0 0.0
    %51 = vmatpush1.msra.mxu0 0.0
    %52 = vmatprep.subr.mxu0 0.0
    %53 = vmatpush1.msra.mxu0 0.0
    %54 = vmatprep.subr.mxu0 0.0
    %55 = vmatpush1.msra.mxu0 0.0
    %56 = vmatprep.subr.mxu0 0.0
    %57 = vmatpush1.msra.mxu0 0.0
    %58 = vmatprep.subr.mxu0 0.0
    %59 = vmatpush1.msra.mxu0 0.0
    %60 = vmatprep.subr.mxu0 0.0
    %61 = vmatpush1.msra.mxu0 0.0
    %62 = vmatprep.subr.mxu0 0.0
    %63 = vmatpush1.msra.mxu0 0.0
    %64 = vmatprep.subr.mxu0 0.0
    %65 = vmatpush1.msra.mxu0 0.0
    %66 = vmatprep.subr.mxu0 0.0
    %67 = vmatpush1.msra.mxu0 0.0
    %68 = vmatprep.subr.mxu0 0.0
    %69 = vmatpush1.msra.mxu0 0.0
    %70 = vmatprep.subr.mxu0 0.0
    %71 = vmatpush1.msra.mxu0 0.0
    %72 = vmatprep.subr.mxu0 0.0
    %73 = vmatpush1.msra.mxu0 0.0
    %74 = vmatprep.subr.mxu0 0.0
    %75 = vmatpush1.msra.mxu0 0.0
    %76 = vmatprep.subr.mxu0 0.0
    %77 = vmatpush1.msra.mxu0 0.0
    %78 = vmatprep.subr.mxu0 0.0
    %79 = vmatpush1.msra.mxu0 0.0
    %80 = vmatprep.subr.mxu0 0.0
    %81 = vmatpush1.msra.mxu0 0.0
    %82 = vmatprep.subr.mxu0 0.0
    %83 = vmatpush1.msra.mxu0 0.0
    %84 = vmatprep.subr.mxu0 0.0
    %85 = vmatpush1.msra.mxu0 0.0
    %86 = vmatprep.subr.mxu0 0.0
    %87 = vmatpush1.msra.mxu0 0.0
    %88 = vmatprep.subr.mxu0 0.0
    %89 = vmatpush1.msra.mxu0 0.0
    %90 = vmatprep.subr.mxu0 0.0
    %91 = vmatpush1.msra.mxu0 0.0
    %92 = vmatprep.subr.mxu0 0.0
    %93 = vmatpush1.msra.mxu0 0.0
    %94 = vmatprep.subr.mxu0 0.0
    %95 = vmatpush1.msra.mxu0 0.0
    %96 = vmatprep.subr.mxu0 0.0
    %97 = vmatpush1.msra.mxu0 0.0
    %98 = vmatprep.subr.mxu0 0.0
    %99 = vmatpush1.msra.mxu0 0.0
    %100 = vmatprep.mubr.f32.mxu0 0.0
    %101 = vmatmul.mubr.f32.gmra.mrb[0].mxu0 %v34
    %v102 = vpop.f32.mrb[0].mxu0
    %v103 = vadd.f32 0.0, %v102
    %v104 = vpop.f32.mrb[0].mxu0
    %105 = vdwg.mxu0
    %v107 = vsel %vm32, %v27, 0
    %109 = vmatprep.subr.mxu0 0.0
    %110 = vmatpush1.msra.mxu0 %v30
    %111 = vmatprep.subr.mxu0 0.0
    %112 = vmatpush1.msra.mxu0 %v31
    %113 = vmatprep.subr.mxu0 0.0
    %114 = vmatpush1.msra.mxu0 0.0
    %115 = vmatprep.subr.mxu0 0.0
    %116 = vmatpush1.msra.mxu0 0.0
    %117 = vmatprep.subr.mxu0 0.0
    %118 = vmatpush1.msra.mxu0 0.0
    %119 = vmatprep.subr.mxu0 0.0
    %120 = vmatpush1.msra.mxu0 0.0
    %121 = vmatprep.subr.mxu0 0.0
    %122 = vmatpush1.msra.mxu0 0.0
    %123 = vmatprep.subr.mxu0 0.0
    %124 = vmatpush1.msra.mxu0 0.0
    %125 = vmatprep.subr.mxu0 0.0
    %126 = vmatpush1.msra.mxu0 0.0
    %127 = vmatprep.subr.mxu0 0.0
    %128 = vmatpush1.msra.mxu0 0.0
    %129 = vmatprep.subr.mxu0 0.0
    %130 = vmatpush1.msra.mxu0 0.0
    %131 = vmatprep.subr.mxu0 0.0
    %132 = vmatpush1.msra.mxu0 0.0
    %133 = vmatprep.subr.mxu0 0.0
    %134 = vmatpush1.msra.mxu0 0.0
    %135 = vmatprep.subr.mxu0 0.0
    %136 = vmatpush1.msra.mxu0 0.0
    %137 = vmatprep.subr.mxu0 0.0
    %138 = vmatpush1.msra.mxu0 0.0
    %139 = vmatprep.subr.mxu0 0.0
    %140 = vmatpush1.msra.mxu0 0.0
    %141 = vmatprep.subr.mxu0 0.0
    %142 = vmatpush1.msra.mxu0 0.0
    %143 = vmatprep.subr.mxu0 0.0
    %144 = vmatpush1.msra.mxu0 0.0
    %145 = vmatprep.subr.mxu0 0.0
    %146 = vmatpush1.msra.mxu0 0.0
    %147 = vmatprep.subr.mxu0 0.0
    %148 = vmatpush1.msra.mxu0 0.0
    %149 = vmatprep.subr.mxu0 0.0
    %150 = vmatpush1.msra.mxu0 0.0
    %151 = vmatprep.subr.mxu0 0.0
    %152 = vmatpush1.msra.mxu0 0.0
    %153 = vmatprep.subr.mxu0 0.0
    %154 = vmatpush1.msra.mxu0 0.0
    %155 = vmatprep.subr.mxu0 0.0
    %156 = vmatpush1.msra.mxu0 0.0
    %157 = vmatprep.subr.mxu0 0.0
    %158 = vmatpush1.msra.mxu0 0.0
    %159 = vmatprep.subr.mxu0 0.0
    %160 = vmatpush1.msra.mxu0 0.0
    %161 = vmatprep.subr.mxu0 0.0
    %162 = vmatpush1.msra.mxu0 0.0
    %163 = vmatprep.subr.mxu0 0.0
    %164 = vmatpush1.msra.mxu0 0.0
    %165 = vmatprep.subr.mxu0 0.0
    %166 = vmatpush1.msra.mxu0 0.0
    %167 = vmatprep.subr.mxu0 0.0
    %168 = vmatpush1.msra.mxu0 0.0
    %169 = vmatprep.subr.mxu0 0.0
    %170 = vmatpush1.msra.mxu0 0.0
    %171 = vmatprep.subr.mxu0 0.0
    %172 = vmatpush1.msra.mxu0 0.0
    %173 = vmatprep.mubr.f32.mxu0 0.0
    %174 = vmatmul.mubr.f32.gmra.mrb[0].mxu0 %v107
    %v175 = vpop.f32.mrb[0].mxu0
    %v176 = vadd.f32 0.0, %v175
    %v177 = vpop.f32.mrb[0].mxu0
    %178 = vdwg.mxu0
    %vm179 = vcmask 257024
    %180 = vst.msk [vmem:[#allocation2] sm:$0xf] %vm179, %v103
    %181 = vst.msk [vmem:[#allocation2 + $0x4] sm:$0xf] %vm179, %v176
    // Predicated region
    $region10: #{_mask_forward_core.1} parent=1 // pred_check
      _
    $region11: #{_mask_forward_core.1} parent=1 // pred_check_branch
      %183 = sbr.rel (0) target = $region13
    $region12: #{_mask_forward_core.1} parent=1 // pred_region
      %s185 = ssub.s32 128, 128
      %186 = vsyncadd [#allocation3], %s185
      %s187 = sshll.u32 [#allocation2], 4
      %s188 = int_to_ptr.vmem [resolvable:$true] %s187
      %193 = dma.vmem_to_hbm [thread:$0]  %s188, 128, %s2, [#allocation3], 64, 64, 4
    $region13: #{_mask_forward_core.1} parent=1 // pred_fallthru
      _
    // Predicated region
    $region14: #{_mask_forward_core.1} parent=1 // pred_check
      _
    $region15: #{_mask_forward_core.1} parent=1 // pred_check_branch
      %195 = sbr.rel (0) target = $region17
    $region16: #{_mask_forward_core.1} parent=1 // pred_region
      %196 = dma.done [#allocation3], 128
    $region17: #{_mask_forward_core.1} parent=1 // pred_fallthru
      _
    %197 = vsyncpa [#allocation3], 1

</llo_original>
